<compile_context>
chip_gen: v7x
topology: tpu7x:2x2x1
jax: 0.10.0
libtpu: 0.0.40
codegen_flags: <defaults>
</compile_context>

<pallas_src>
import math

import jax
import jax.numpy as jnp
from jax import lax
from jax.experimental import pallas as pl
from jax.experimental.pallas import tpu as pltpu


def _round_up(x: int, m: int) -> int:
    return ((x + m - 1) // m) * m


def _vmem_capacity_bytes() -> int:
    """Per-core VMEM capacity; conservative 64 MiB (v7x) if the query fails."""
    try:
        return int(pltpu.get_tpu_info().vmem_capacity_bytes)
    except Exception:
        return 64 << 20


def _device_kind() -> str:
    try:
        return jax.devices()[0].device_kind.lower()
    except Exception:
        return ""


def _is_old_gen(kind: str) -> bool:
    # v2-v5 have 128-wide MXUs; v6e/v7x are 256-wide.
    return any(tag in kind for tag in ("v2", "v3", "v4", "v5"))


# ----------------------------------------------------------------------------
# Kernels
# ----------------------------------------------------------------------------
def _embedding_onehot_kernel(idx_ref, table_ref, out_ref, iota_ref):
    # idx_ref:   (TOK, 1)  int32   token ids for this tile
    # table_ref: (Vp, E)   table dtype, VMEM-resident, single-buffered
    # out_ref:   (TOK, E)  gathered embeddings for this tile
    # iota_ref:  (TOK, Vp) int32 scratch: column-index iota, built once
    @pl.when(pl.program_id(0) == 0)
    def _():
        iota_ref[...] = lax.broadcasted_iota(jnp.int32, iota_ref.shape, 1)

    ids = idx_ref[...]                                   # (TOK, 1)
    # one-hot selection matrix, int32 compares (v5e-safe VPU path), exact 0/1
    one_hot = (iota_ref[...] == ids).astype(table_ref.dtype)
    # MXU gather: (TOK, Vp) @ (Vp, E) -> (TOK, E), f32 accumulation (exact)
    out_ref[...] = jnp.dot(
        one_hot, table_ref[...], preferred_element_type=jnp.float32
    ).astype(out_ref.dtype)


def _embedding_gather_kernel(idx_ref, table_ref, out_ref):
    # Large-vocab path: O(TOK*E) in-kernel gather on the VMEM-resident table
    # instead of O(TOK*Vp*E) MXU work.
    ids = idx_ref[...][:, 0]                             # (TOK,)
    out_ref[...] = jnp.take(table_ref[...], ids, axis=0).astype(out_ref.dtype)


# ----------------------------------------------------------------------------
# Wrapper
# ----------------------------------------------------------------------------
def embedding_lookup(indices: jax.Array, table: jax.Array, *,
                     tok_tile: int | None = None) -> jax.Array:
    """Gather rows of `table` (V, E) at `indices` (B, S) -> (B, S, E)."""
    B, S = indices.shape
    V, E = table.shape
    dtype = table.dtype
    itemsize = jnp.dtype(dtype).itemsize

    kind = _device_kind()
    old_gen = _is_old_gen(kind)
    if tok_tile is None:
        # 256 fills the 256-wide MXU M dim on v6e/v7x; 128 matches v5e's MXU.
        tok_tile = 128 if old_gen else 256

    # --- token-axis layout: shrink the tile for tiny inputs (multiple of 8)
    # instead of padding all the way up to 128/256 tokens.
    n_tok = B * S
    eff_tile = min(tok_tile, _round_up(max(n_tok, 1), 8))
    n_pad = _round_up(max(n_tok, 1), eff_tile)
    n_tiles = n_pad // eff_tile

    flat_idx = jnp.zeros((n_pad, 1), dtype=jnp.int32)
    flat_idx = lax.dynamic_update_slice(
        flat_idx, indices.reshape(n_tok, 1).astype(jnp.int32), (0, 0)
    )

    # --- vocab-axis layout: pad to a multiple of 128 (MXU / lane alignment);
    # valid ids never select padded rows, so this is exact.
    v_pad = _round_up(V, 128)
    if v_pad != V:
        table_p = jnp.zeros((v_pad, E), dtype=dtype).at[:V, :].set(table)
    else:
        table_p = table

    # --- strategy dispatch + VMEM budget ------------------------------------
    vmem_cap = _vmem_capacity_bytes()
    vmem_ceiling = int(0.85 * vmem_cap)        # headroom for Mosaic scratch
    table_bytes = v_pad * E * itemsize         # single buffer (Buffered(1))
    io_bytes = 2 * (eff_tile * E * itemsize) + 2 * (eff_tile * 4)
    onehot_tmp_bytes = 3 * eff_tile * v_pad * 4  # iota scratch + cmp/select temps
    headroom = 12 << 20

    # one-hot MXU gather wins for small vocabs; crossover to a plain gather
    # is earlier on v5e (slower MXU, no bf16 VPU).
    onehot_max_v = 2048 if old_gen else 8192
    use_onehot = v_pad <= onehot_max_v

    needed = table_bytes + io_bytes + headroom + (onehot_tmp_bytes if use_onehot else 0)
    if needed > vmem_ceiling:
        # TODO(synk): for tables that do not fit VMEM, implement a
        # scalar-prefetch / manual-DMA row gather (table via memory_space=
        # pl.ANY, >=8 row copies in flight into a (TOK, E) staging buffer)
        # so huge vocabularies hit the HBM roofline; plain-JAX gather for now.
        return table[indices]

    vmem_limit = int(min(max(needed, 32 << 20), vmem_ceiling))

    # --- specs ---------------------------------------------------------------
    # full table, constant block index + single buffer -> fetched once,
    # VMEM-resident, exactly one copy in VMEM
    table_spec = pl.BlockSpec((v_pad, E), lambda i: (0, 0),
                              pipeline_mode=pl.Buffered(1))
    # token-id tile for this grid step (double-buffered by default)
    idx_spec = pl.BlockSpec((eff_tile, 1), lambda i: (i, 0))
    # sublane/lane-dense output tile -> unmasked vector stores
    out_spec = pl.BlockSpec((eff_tile, E), lambda i: (i, 0))

    if use_onehot:
        kernel = _embedding_onehot_kernel
        scratch = [pltpu.VMEM((eff_tile, v_pad), jnp.int32)]
        flops = 2 * n_pad * v_pad * E
    else:
        kernel = _embedding_gather_kernel
        scratch = []
        flops = 0

    cost = pl.CostEstimate(
        flops=flops,
        transcendentals=0,
        bytes_accessed=table_bytes + n_pad * (4 + E * itemsize),
    )

    grid_spec = pltpu.PrefetchScalarGridSpec(
        num_scalar_prefetch=0,
        grid=(n_tiles,),
        in_specs=[idx_spec, table_spec],
        out_specs=out_spec,
        scratch_shapes=scratch,
    )

    out_flat = pl.pallas_call(
        kernel,
        out_shape=jax.ShapeDtypeStruct((n_pad, E), dtype),
        grid_spec=grid_spec,
        compiler_params=pltpu.CompilerParams(
            # each grid step writes a disjoint output tile -> safe to shard
            # across TensorCores (2x on v7x, neutral on v5e/v6e)
            dimension_semantics=("parallel",),
            vmem_limit_bytes=vmem_limit,
        ),
        cost_estimate=cost,
    )(flat_idx, table_p)

    return out_flat[:n_tok].reshape(B, S, E)


def init_embedding_table(key, vocab_size: int, embedding_size: int) -> jax.Array:
    """xavier_uniform_ with gain = calculate_gain('relu') = sqrt(2)."""
    gain = math.sqrt(2.0)
    bound = gain * math.sqrt(6.0 / (vocab_size + embedding_size))
    return jax.random.uniform(
        key, (vocab_size, embedding_size), dtype=jnp.float32,
        minval=-bound, maxval=bound,
    )


if __name__ == "__main__":
    key = jax.random.PRNGKey(0)
    k_w, k_idx = jax.random.split(key)

    vocab_size = 32
    embedding_size = 128
    batch = 2
    seq = 8

    table = init_embedding_table(k_w, vocab_size, embedding_size)
    input_sequence = jax.random.randint(
        k_idx, (batch, seq), minval=0, maxval=vocab_size, dtype=jnp.int32
    )

    out = embedding_lookup(input_sequence, table)
    out = jax.block_until_ready(out)

    # correctness check against plain-JAX gather
    ref = table[input_sequence]
    assert out.shape == (batch, seq, embedding_size)
    assert jnp.allclose(out, ref), "mismatch vs reference gather"

    print("KERNEL_OK")
</pallas_src>

<mosaic_0001>
module attributes {stable_mosaic.version = 11 : i64} {
  func.func @_embedding_onehot_kernel(%arg0: i32, %arg1: memref<16x1xi32, #tpu.memory_space<vmem>>, %arg2: memref<128x128xf32, #tpu.memory_space<vmem>>, %arg3: memref<16x128xf32, #tpu.memory_space<vmem>>, %arg4: memref<16x128xi32, #tpu.memory_space<vmem>>) attributes {dimension_semantics = [#tpu.dimension_semantics<parallel>], iteration_bounds = array<i64: 1>, scalar_prefetch = 0 : i64, scratch_operands = 1 : i64, tpu.core_type = #tpu.core_type<tc>, window_params = [{transform_indices = @transform_0, window_bounds = array<i64: 16, 1>}, {pipeline_mode = #tpu.pipeline_mode<synchronous>, transform_indices = @transform_1, window_bounds = array<i64: 128, 128>}, {transform_indices = @transform_2, window_bounds = array<i64: 16, 128>}]} {
    %c0_i32 = arith.constant 0 : i32
    %0 = arith.cmpi eq, %arg0, %c0_i32 : i32
    %1 = arith.extui %0 : i1 to i32
    %c0_i32_0 = arith.constant 0 : i32
    %2 = arith.cmpi ne, %1, %c0_i32_0 : i32
    scf.if %2 {
      %12 = tpu.iota {dimensions = array<i32: 1>} : vector<16x128xi32>
      %c0_8 = arith.constant 0 : index
      %c0_9 = arith.constant 0 : index
      %13 = vector.load %arg4[%c0_8, %c0_9] : memref<16x128xi32, #tpu.memory_space<vmem>>, vector<16x128xi32>
      tpu.vector_store %arg4[%c0_8, %c0_9], %12 {strides = array<i32>} : memref<16x128xi32, #tpu.memory_space<vmem>>, vector<16x128xi32>,
    } else {
    }
    %c0 = arith.constant 0 : index
    %c0_1 = arith.constant 0 : index
    %3 = vector.load %arg1[%c0, %c0_1] : memref<16x1xi32, #tpu.memory_space<vmem>>, vector<16x1xi32>
    %c0_2 = arith.constant 0 : index
    %c0_3 = arith.constant 0 : index
    %4 = vector.load %arg4[%c0_2, %c0_3] : memref<16x128xi32, #tpu.memory_space<vmem>>, vector<16x128xi32>
    %5 = vector.broadcast %3 : vector<16x1xi32> to vector<16x128xi32>
    %6 = arith.cmpi eq, %4, %5 : vector<16x128xi32>
    %7 = arith.extui %6 : vector<16x128xi1> to vector<16x128xi32>
    %8 = arith.sitofp %7 : vector<16x128xi32> to vector<16x128xf32>
    %c0_4 = arith.constant 0 : index
    %c0_5 = arith.constant 0 : index
    %9 = vector.load %arg2[%c0_4, %c0_5] : memref<128x128xf32, #tpu.memory_space<vmem>>, vector<128x128xf32>
    %cst = arith.constant dense<0.000000e+00> : vector<16x128xf32>
    %10 = tpu.matmul %8, %9, %cst {dimension_numbers = #tpu.dot_dimension_numbers<[1], [0], [0], [1], [0, 0, 1, 1], [], []>} : vector<16x128xf32>, vector<128x128xf32>, vector<16x128xf32> -> vector<16x128xf32>
    %c0_6 = arith.constant 0 : index
    %c0_7 = arith.constant 0 : index
    %11 = vector.load %arg3[%c0_6, %c0_7] : memref<16x128xf32, #tpu.memory_space<vmem>>, vector<16x128xf32>
    tpu.vector_store %arg3[%c0_6, %c0_7], %10 {strides = array<i32>} : memref<16x128xf32, #tpu.memory_space<vmem>>, vector<16x128xf32>,
    return
  }
  func.func @transform_0(%arg0: i32) -> (i32, i32) {
    %c0_i32 = arith.constant 0 : i32
    %c0_i32_0 = arith.constant 0 : i32
    return %arg0, %c0_i32 : i32, i32
  }
  func.func @transform_1(%arg0: i32) -> (i32, i32) {
    %c0_i32 = arith.constant 0 : i32
    %c0_i32_0 = arith.constant 0 : i32
    %c0_i32_1 = arith.constant 0 : i32
    return %c0_i32, %c0_i32_0 : i32, i32
  }
  func.func @transform_2(%arg0: i32) -> (i32, i32) {
    %c0_i32 = arith.constant 0 : i32
    %c0_i32_0 = arith.constant 0 : i32
    return %arg0, %c0_i32 : i32, i32
  }
}

</mosaic_0001>

<llo_original>
// kernel: tpu_custom_call.1
$region0: #{tpu_custom_call.1}
  #allocation0 [shape = 'u32[]', space=smem, size = 0x4, offset = 0x4, fixed_abs, tag = 'smem constant byte address 0x4 - core index']
  #allocation1 [shape = 'u32[144,128]{1,0:T(1,128)}', space=vmem, size = 0x12000, scoped, tag = 'internal scratch']
  #allocation2 [shape = 's32[16,128]{1,0:T(8,128)}', space=vmem, size = 0x2000, scoped, tag = 'scratch operand']
  %s0 = inlined_call_operand.vmem [shape: s32[16,1], index: 0, kind: input, shape index: {}]
  %s1 = inlined_call_operand.hbm [shape: f32[128,128], index: 1, kind: input, shape index: {}]
  %s2 = inlined_call_operand.hbm [shape: f32[16,128], index: 2, kind: output, shape index: {}]
  %s3 = sld [smem:[#allocation0]]
  $region26: #{tpu_custom_call.1} parent=0
    _
  %s5 = ssub.s32 1, %s3
  %s6 = scalar_select 0, %s5, %s3
  $region1: #{tpu_custom_call.1} parent=0
    #allocation3 [shape = 'u8[65536]{0}', space=vmem, size = 0x10000, scoped, tag = 'input window, operand 1, single buffered']
    #allocation4 [shape = 's32[1]{0}', space=sflag, size = 0x4, scoped, tag = 'scoped memory for tpu_custom_call.1']
    #allocation5 [shape = 's32[1]{0}', space=sflag, size = 0x4, scoped, tag = 'scoped memory for tpu_custom_call.1']
    #allocation6 [shape = 'u8[8192]{0}', space=vmem, size = 0x2000, scoped, tag = 'output window, operand 0, single buffered']
    %7 = vsyncpa [#allocation4], 0
    %8 = vsyncpa [#allocation5], 0
    // Predicated region
    $region2: #{tpu_custom_call.1} parent=1 // pred_check
      _
    $region3: #{tpu_custom_call.1} parent=1 // pred_check_branch
      %10 = sbr.rel (0) target = $region5
    $region4: #{tpu_custom_call.1} parent=1 // pred_region
      _
    $region5: #{tpu_custom_call.1} parent=1 // pred_fallthru
      _
    // Predicated region
    $region6: #{tpu_custom_call.1} parent=1 // pred_check
      _
    $region7: #{tpu_custom_call.1} parent=1 // pred_check_branch
      %12 = sbr.rel (0) target = $region9
    $region8: #{tpu_custom_call.1} parent=1 // pred_region
      %s14 = ssub.s32 2048, 2048
      %15 = vsyncadd [#allocation4], %s14
      %s16 = sshll.u32 [#allocation3], 4
      %s17 = int_to_ptr.vmem [resolvable:$true] %s16
      %22 = dma.hbm_to_vmem [thread:$0]  %s1, 2048, %s17, [#allocation4], 128, 128, 8
    $region9: #{tpu_custom_call.1} parent=1 // pred_fallthru
      _
    // Predicated region
    $region10: #{tpu_custom_call.1} parent=1 // pred_check
      _
    $region11: #{tpu_custom_call.1} parent=1 // pred_check_branch
      %24 = sbr.rel (0) target = $region13
    $region12: #{tpu_custom_call.1} parent=1 // pred_region
      %25 = dma.done [#allocation4], 2048
    $region13: #{tpu_custom_call.1} parent=1 // pred_fallthru
      _
    %p26 = scmp.eq.s32.totalorder 0, 0
    // Predicated region
    $region14: #{tpu_custom_call.1} parent=1 // pred_check
      %p27 = pneg %p26
    $region15: #{tpu_custom_call.1} parent=1 // pred_check_branch
      %29 = sbr.rel (%p27) target = $region17
    $region16: #{tpu_custom_call.1} parent=1 // pred_region
      %v30 = vlaneseq
      %v31 = vand.u32 %v30, 127
      %32 = vst [vmem:[#allocation2] sm:$0xff] %v31
      %33 = vst [vmem:[#allocation2 + $0x8] sm:$0xff] %v31
    $region17: #{tpu_custom_call.1} parent=1 // pred_fallthru
      _
    %v34 = vld [vmem:[%s0] sm:$0xff]
    %v35 = vld [vmem:[%s0 + $0x8] sm:$0xff]
    %v36 = vld [vmem:[#allocation2] sm:$0xff]
    %v37 = vld [vmem:[#allocation2 + $0x8] sm:$0xff]
    %38 = vset.pattern.permute.xlu0 0
    %39 = vperm.xlu0 %38, %v34
    %v40 = vpop.permute.xlu0 %39
    %41 = vset.pattern.permute.xlu0 0
    %42 = vperm.xlu0 %41, %v35
    %v43 = vpop.permute.xlu0 %42
    %vm44 = vcmp.eq.s32.totalorder %v36, %v40
    %vm45 = vcmp.eq.s32.totalorder %v37, %v43
    %v46 = vsel %vm44, 1, 0
    %v47 = vsel %vm45, 1, 0
    %v48 = vcvt.s32.f32 %v46
    %v49 = vcvt.s32.f32 %v47
    %v50 = vld [vmem:[#allocation3] sm:$0xff]
    %v51 = vld [vmem:[#allocation3 + $0x8] sm:$0xff]
    %v52 = vld [vmem:[#allocation3 + $0x10] sm:$0xff]
    %v53 = vld [vmem:[#allocation3 + $0x18] sm:$0xff]
    %v54 = vld [vmem:[#allocation3 + $0x20] sm:$0xff]
    %v55 = vld [vmem:[#allocation3 + $0x28] sm:$0xff]
    %v56 = vld [vmem:[#allocation3 + $0x30] sm:$0xff]
    %v57 = vld [vmem:[#allocation3 + $0x38] sm:$0xff]
    %v58 = vld [vmem:[#allocation3 + $0x40] sm:$0xff]
    %v59 = vld [vmem:[#allocation3 + $0x48] sm:$0xff]
    %v60 = vld [vmem:[#allocation3 + $0x50] sm:$0xff]
    %v61 = vld [vmem:[#allocation3 + $0x58] sm:$0xff]
    %v62 = vld [vmem:[#allocation3 + $0x60] sm:$0xff]
    %v63 = vld [vmem:[#allocation3 + $0x68] sm:$0xff]
    %v64 = vld [vmem:[#allocation3 + $0x70] sm:$0xff]
    %v65 = vld [vmem:[#allocation3 + $0x78] sm:$0xff]
    %66 = vmatprep.subr.mxu0 0.0
    %67 = vmatpush1.msra.mxu0 %v50
    %68 = vmatprep.subr.mxu0 0.0
    %69 = vmatpush1.msra.mxu0 %v51
    %70 = vmatprep.subr.mxu0 0.0
    %71 = vmatpush1.msra.mxu0 %v52
    %72 = vmatprep.subr.mxu0 0.0
    %73 = vmatpush1.msra.mxu0 %v53
    %74 = vmatprep.subr.mxu0 0.0
    %75 = vmatpush1.msra.mxu0 %v54
    %76 = vmatprep.subr.mxu0 0.0
    %77 = vmatpush1.msra.mxu0 %v55
    %78 = vmatprep.subr.mxu0 0.0
    %79 = vmatpush1.msra.mxu0 %v56
    %80 = vmatprep.subr.mxu0 0.0
    %81 = vmatpush1.msra.mxu0 %v57
    %82 = vmatprep.subr.mxu0 0.0
    %83 = vmatpush1.msra.mxu0 %v58
    %84 = vmatprep.subr.mxu0 0.0
    %85 = vmatpush1.msra.mxu0 %v59
    %86 = vmatprep.subr.mxu0 0.0
    %87 = vmatpush1.msra.mxu0 %v60
    %88 = vmatprep.subr.mxu0 0.0
    %89 = vmatpush1.msra.mxu0 %v61
    %90 = vmatprep.subr.mxu0 0.0
    %91 = vmatpush1.msra.mxu0 %v62
    %92 = vmatprep.subr.mxu0 0.0
    %93 = vmatpush1.msra.mxu0 %v63
    %94 = vmatprep.subr.mxu0 0.0
    %95 = vmatpush1.msra.mxu0 %v64
    %96 = vmatprep.subr.mxu0 0.0
    %97 = vmatpush1.msra.mxu0 %v65
    %98 = vmatprep.subr.mxu0 0.0
    %99 = vmatpush1.msra.mxu0 0.0
    %100 = vmatprep.subr.mxu0 0.0
    %101 = vmatpush1.msra.mxu0 0.0
    %102 = vmatprep.subr.mxu0 0.0
    %103 = vmatpush1.msra.mxu0 0.0
    %104 = vmatprep.subr.mxu0 0.0
    %105 = vmatpush1.msra.mxu0 0.0
    %106 = vmatprep.subr.mxu0 0.0
    %107 = vmatpush1.msra.mxu0 0.0
    %108 = vmatprep.subr.mxu0 0.0
    %109 = vmatpush1.msra.mxu0 0.0
    %110 = vmatprep.subr.mxu0 0.0
    %111 = vmatpush1.msra.mxu0 0.0
    %112 = vmatprep.subr.mxu0 0.0
    %113 = vmatpush1.msra.mxu0 0.0
    %114 = vmatprep.subr.mxu0 0.0
    %115 = vmatpush1.msra.mxu0 0.0
    %116 = vmatprep.subr.mxu0 0.0
    %117 = vmatpush1.msra.mxu0 0.0
    %118 = vmatprep.subr.mxu0 0.0
    %119 = vmatpush1.msra.mxu0 0.0
    %120 = vmatprep.subr.mxu0 0.0
    %121 = vmatpush1.msra.mxu0 0.0
    %122 = vmatprep.subr.mxu0 0.0
    %123 = vmatpush1.msra.mxu0 0.0
    %124 = vmatprep.subr.mxu0 0.0
    %125 = vmatpush1.msra.mxu0 0.0
    %126 = vmatprep.subr.mxu0 0.0
    %127 = vmatpush1.msra.mxu0 0.0
    %128 = vmatprep.subr.mxu0 0.0
    %129 = vmatpush1.msra.mxu0 0.0
    %130 = vmatprep.mubr.f32.mxu0 0.0
    %131 = vmatmul.mubr.f32.gmra.mrb[0].mxu0 %v48
    %v132 = vpop.f32.mrb[0].mxu0
    %v133 = vadd.f32 0.0, %v132
    %v134 = vpop.f32.mrb[0].mxu0
    %135 = vmatprep.mubr.f32.mxu0 0.0
    %136 = vmatmul.mubr.f32.gmra.mrb[0].mxu0 %v49
    %v137 = vpop.f32.mrb[0].mxu0
    %v138 = vadd.f32 0.0, %v137
    %v139 = vpop.f32.mrb[0].mxu0
    %140 = vdwg.mxu0
    %141 = vst [vmem:[#allocation6] sm:$0xff] %v133
    %142 = vst [vmem:[#allocation6 + $0x8] sm:$0xff] %v138
    // Predicated region
    $region18: #{tpu_custom_call.1} parent=1 // pred_check
      _
    $region19: #{tpu_custom_call.1} parent=1 // pred_check_branch
      %144 = sbr.rel (0) target = $region21
    $region20: #{tpu_custom_call.1} parent=1 // pred_region
      %s146 = ssub.s32 256, 256
      %147 = vsyncadd [#allocation5], %s146
      %s148 = sshll.u32 [#allocation6], 4
      %s149 = int_to_ptr.vmem [resolvable:$true] %s148
      %154 = dma.vmem_to_hbm [thread:$0]  %s149, 256, %s2, [#allocation5], 128, 128, 8
    $region21: #{tpu_custom_call.1} parent=1 // pred_fallthru
      _
    // Predicated region
    $region22: #{tpu_custom_call.1} parent=1 // pred_check
      _
    $region23: #{tpu_custom_call.1} parent=1 // pred_check_branch
      %156 = sbr.rel (0) target = $region25
    $region24: #{tpu_custom_call.1} parent=1 // pred_region
      %157 = dma.done [#allocation5], 256
    $region25: #{tpu_custom_call.1} parent=1 // pred_fallthru
      _
    %158 = vsyncpa [#allocation4], 1
    %159 = vsyncpa [#allocation5], 1

</llo_original>
